<compile_context>
chip_gen: v7x
topology: tpu7x:2x2x1
jax: 0.10.0
libtpu: 0.0.40
codegen_flags: <defaults>
</compile_context>

<pallas_src>
import jax
import jax.numpy as jnp
from jax.experimental import pallas as pl
from jax.experimental.pallas import tpu as pltpu

IN_FEATURES = 28 * 28        # 784, as implied by nn.Linear(28*28, latent_size)
LATENT_SIZE = 10
OUT_PAD = 128                # lane-dense output slab width (>= LATENT_SIZE)


def pick_tile_b(B):
    """Batch tile: multiple of 16 (bf16 sublane packing), big enough to amortize
    the ~0.35us per-grid-step overhead, small enough that small batches still
    produce >=2 parallel grid steps (v7x megacore)."""
    if B >= 2048:
        return 1024
    t = -(-B // 2)                      # ceil(B / 2) -> at least 2 grid steps
    t = ((t + 15) // 16) * 16           # round up to a multiple of 16
    return max(16, min(t, 512))


def encoder_kernel(x_ref, w_ref, b_ref, o_ref):
    # y = sigmoid(x @ W + b) on one batch tile.
    # x arrives f32 (single HBM pass); cast to bf16 in-register for the MXU.
    x_bf16 = x_ref[...].astype(jnp.bfloat16)
    acc = jnp.dot(x_bf16, w_ref[...], preferred_element_type=jnp.float32)
    # Epilogue in f32 (v5e has no bf16 VPU/EUP); downcast only at the store.
    o_ref[...] = jax.nn.sigmoid(acc + b_ref[...]).astype(o_ref.dtype)


def encoder_forward(x, params, *, latent_size=LATENT_SIZE, tile_b=None):
    """x: any array whose reshape(B, -1) gives [B, 784]. Returns [B, latent] bf16."""
    w, b = params            # w: [784, OUT_PAD] bf16, b: [1, OUT_PAD] f32
    B = x.shape[0]
    x2d = x.reshape(B, -1)   # no pad, no dtype cast -> no extra HBM pass over x
    assert x2d.shape[1] == IN_FEATURES, "Encoder expects 28*28 input features"

    if tile_b is None:
        tile_b = pick_tile_b(B)
    n_tiles = pl.cdiv(B, tile_b)

    cost = pl.CostEstimate(
        flops=2 * B * IN_FEATURES * OUT_PAD,
        transcendentals=B * OUT_PAD,
        bytes_accessed=(B * IN_FEATURES * 4             # x (f32, read once)
                        + IN_FEATURES * OUT_PAD * 2     # W (bf16, resident)
                        + OUT_PAD * 4                   # b (f32)
                        + B * OUT_PAD * 2),             # out (bf16)
    )

    out = pl.pallas_call(
        encoder_kernel,
        out_shape=jax.ShapeDtypeStruct((B, OUT_PAD), jnp.bfloat16),
        grid=(n_tiles,),
        in_specs=[
            # x tiled along batch; tail tile is handled by Pallas (partial block).
            pl.BlockSpec((tile_b, IN_FEATURES), lambda i: (i, 0)),
            # W / b: constant index_map -> VMEM-resident across grid steps.
            pl.BlockSpec((IN_FEATURES, OUT_PAD), lambda i: (0, 0)),
            pl.BlockSpec((1, OUT_PAD), lambda i: (0, 0)),
        ],
        out_specs=pl.BlockSpec((tile_b, OUT_PAD), lambda i: (i, 0)),
        compiler_params=pltpu.CompilerParams(
            dimension_semantics=("parallel",)),          # megacore sharding
        cost_estimate=cost,
    )(x2d, w, b)

    # Lane padding (cols >= latent hold sigmoid(0)=0.5) is never consumed.
    return out[:, :latent_size]


def init_params(key, latent_size=LATENT_SIZE):
    """Deterministic init matching nn.Linear(784, latent_size).
    Weight stored pre-transposed [in, out], zero-padded to OUT_PAD lanes,
    cast to bf16 (halves weight HBM traffic, native MXU rate); bias kept f32."""
    kw, kb = jax.random.split(key)
    bound = 1.0 / jnp.sqrt(IN_FEATURES)
    w = jax.random.uniform(kw, (IN_FEATURES, latent_size), jnp.float32,
                           -bound, bound)
    b = jax.random.uniform(kb, (latent_size,), jnp.float32, -bound, bound)
    w_pad = jnp.zeros((IN_FEATURES, OUT_PAD), jnp.float32)
    w_pad = w_pad.at[:, :latent_size].set(w)
    b_pad = jnp.zeros((1, OUT_PAD), jnp.float32)
    b_pad = b_pad.at[0, :latent_size].set(b)
    return w_pad.astype(jnp.bfloat16), b_pad


def reference_forward(x, params, latent_size=LATENT_SIZE):
    """Plain-JAX reference (same bf16 operands + f32 accumulation, f32 output)."""
    w, b = params
    x2d = x.reshape(x.shape[0], -1).astype(jnp.bfloat16)
    y = jnp.dot(x2d, w, preferred_element_type=jnp.float32) + b
    return jax.nn.sigmoid(y)[:, :latent_size]


if __name__ == "__main__":
    key = jax.random.PRNGKey(0)
    k_x, k_p = jax.random.split(key)

    # B=37 exercises the adaptive tiling: tile_b=32 -> 2 parallel grid steps,
    # with a 5-row tail tile handled by Pallas' implicit block padding.
    B = 37
    x = jax.random.normal(k_x, (B, IN_FEATURES), jnp.float32)
    params = init_params(k_p)

    out = encoder_forward(x, params)
    out = jax.block_until_ready(out)

    ref = reference_forward(x, params)
    assert out.shape == (B, LATENT_SIZE)
    err = float(jnp.max(jnp.abs(out.astype(jnp.float32) - ref)))
    assert err < 1e-2, err
    print("KERNEL_OK")
</pallas_src>

<mosaic_0001>
module attributes {stable_mosaic.version = 11 : i64} {
  func.func @encoder_kernel(%arg0: i32, %arg1: memref<32x784xf32, #tpu.memory_space<vmem>>, %arg2: memref<784x128xbf16, #tpu.memory_space<vmem>>, %arg3: memref<1x128xf32, #tpu.memory_space<vmem>>, %arg4: memref<32x128xbf16, #tpu.memory_space<vmem>>) attributes {dimension_semantics = [#tpu.dimension_semantics<parallel>], iteration_bounds = array<i64: 2>, scalar_prefetch = 0 : i64, scratch_operands = 0 : i64, tpu.core_type = #tpu.core_type<tc>, window_params = [{transform_indices = @transform_0, window_bounds = array<i64: 32, 784>}, {pipeline_mode = #tpu.pipeline_mode<synchronous>, transform_indices = @transform_1, window_bounds = array<i64: 784, 128>}, {pipeline_mode = #tpu.pipeline_mode<synchronous>, transform_indices = @transform_2, window_bounds = array<i64: 1, 128>}, {transform_indices = @transform_3, window_bounds = array<i64: 32, 128>}]} {
    %c0 = arith.constant 0 : index
    %c0_0 = arith.constant 0 : index
    %0 = vector.load %arg1[%c0, %c0_0] : memref<32x784xf32, #tpu.memory_space<vmem>>, vector<32x784xf32>
    %1 = arith.truncf %0 : vector<32x784xf32> to vector<32x784xbf16>
    %c0_1 = arith.constant 0 : index
    %c0_2 = arith.constant 0 : index
    %2 = vector.load %arg2[%c0_1, %c0_2] : memref<784x128xbf16, #tpu.memory_space<vmem>>, vector<784x128xbf16>
    %cst = arith.constant dense<0.000000e+00> : vector<32x128xf32>
    %3 = tpu.matmul %1, %2, %cst {dimension_numbers = #tpu.dot_dimension_numbers<[1], [0], [0], [1], [0, 0, 1, 1], [], []>} : vector<32x784xbf16>, vector<784x128xbf16>, vector<32x128xf32> -> vector<32x128xf32>
    %c0_3 = arith.constant 0 : index
    %c0_4 = arith.constant 0 : index
    %4 = vector.load %arg3[%c0_3, %c0_4] : memref<1x128xf32, #tpu.memory_space<vmem>>, vector<1x128xf32>
    %5 = vector.broadcast %4 : vector<1x128xf32> to vector<32x128xf32>
    %6 = arith.addf %3, %5 : vector<32x128xf32>
    %7 = arith.negf %6 : vector<32x128xf32>
    %8 = math.exp %7 : vector<32x128xf32>
    %cst_5 = arith.constant 1.000000e+00 : f32
    %9 = vector.broadcast %cst_5 : f32 to vector<32x128xf32>
    %10 = arith.addf %9, %8 : vector<32x128xf32>
    %11 = arith.divf %9, %10 : vector<32x128xf32>
    %12 = arith.truncf %11 : vector<32x128xf32> to vector<32x128xbf16>
    %c0_6 = arith.constant 0 : index
    %c0_7 = arith.constant 0 : index
    %13 = vector.load %arg4[%c0_6, %c0_7] : memref<32x128xbf16, #tpu.memory_space<vmem>>, vector<32x128xbf16>
    tpu.vector_store %arg4[%c0_6, %c0_7], %12 {strides = array<i32>} : memref<32x128xbf16, #tpu.memory_space<vmem>>, vector<32x128xbf16>,
    return
  }
  func.func @transform_0(%arg0: i32) -> (i32, i32) {
    %c0_i32 = arith.constant 0 : i32
    %c0_i32_0 = arith.constant 0 : i32
    return %arg0, %c0_i32 : i32, i32
  }
  func.func @transform_1(%arg0: i32) -> (i32, i32) {
    %c0_i32 = arith.constant 0 : i32
    %c0_i32_0 = arith.constant 0 : i32
    %c0_i32_1 = arith.constant 0 : i32
    return %c0_i32, %c0_i32_0 : i32, i32
  }
  func.func @transform_2(%arg0: i32) -> (i32, i32) {
    %c0_i32 = arith.constant 0 : i32
    %c0_i32_0 = arith.constant 0 : i32
    %c0_i32_1 = arith.constant 0 : i32
    return %c0_i32, %c0_i32_0 : i32, i32
  }
  func.func @transform_3(%arg0: i32) -> (i32, i32) {
    %c0_i32 = arith.constant 0 : i32
    %c0_i32_0 = arith.constant 0 : i32
    return %arg0, %c0_i32 : i32, i32
  }
}

</mosaic_0001>

<llo_original>
// kernel: tpu_custom_call.1
$region0: #{tpu_custom_call.1}
  #allocation0 [shape = 'u32[]', space=smem, size = 0x4, offset = 0x4, fixed_abs, tag = 'smem constant byte address 0x4 - core index']
  #allocation1 [shape = 'u32[144,128]{1,0:T(1,128)}', space=vmem, size = 0x12000, scoped, tag = 'internal scratch']
  %s0 = inlined_call_operand.hbm [shape: f32[37,784], index: 0, kind: input, shape index: {}]
  %s1 = inlined_call_operand.hbm [shape: bf16[784,128], index: 1, kind: input, shape index: {}]
  %s2 = inlined_call_operand.vmem [shape: f32[1,128], index: 2, kind: input, shape index: {}]
  %s3 = inlined_call_operand.hbm [shape: bf16[37,128], index: 3, kind: output, shape index: {}]
  %s4 = sld [smem:[#allocation0]]
  $region53: #{tpu_custom_call.1} parent=0
    _
  %s6 = ssub.s32 1, %s4
  %s7 = scalar_select 0, %s6, %s4
  $region1: #{tpu_custom_call.1} parent=0
    #allocation2 [shape = 'u8[229376]{0}', space=vmem, size = 0x38000, scoped, tag = 'input window, operand 0']
    #allocation3 [shape = 's32[2]{0}', space=sflag, size = 0x8, scoped, tag = 'scoped memory for tpu_custom_call.1']
    #allocation4 [shape = 's32[2]{0}', space=sflag, size = 0x8, scoped, tag = 'scoped memory for tpu_custom_call.1']
    #allocation5 [shape = 'u8[200704]{0}', space=vmem, size = 0x31000, scoped, tag = 'input window, operand 1, single buffered']
    #allocation6 [shape = 's32[1]{0}', space=sflag, size = 0x4, scoped, tag = 'scoped memory for tpu_custom_call.1']
    #allocation7 [shape = 'u8[16384]{0}', space=vmem, size = 0x4000, scoped, tag = 'output window, operand 0']
    %8 = vsyncpa [#allocation3], 0
    %s9 = scalar_lea.sflag [#allocation3], 1
    %10 = vsyncpa %s9, 0
    %11 = vsyncpa [#allocation6], 0
    %12 = vsyncpa [#allocation4], 0
    %s13 = scalar_lea.sflag [#allocation4], 1
    %14 = vsyncpa %s13, 0
    loop: start=0, step=1, limit=4
    $region2: #{tpu_custom_call.1} parent=1 // loop_pre_header
      _
    $region3: #{tpu_custom_call.1} parent=1 // loop_header
      %s16 = sphi 0, %s20
      %p17 = scmp.ge.s32.totalorder %s16, 4
      %s26 = sphi 0, %s28
      %s29 = sphi 0, %s26
      %s30 = sphi 0, %s29
      %s46 = sphi 0, %s30
      %s50 = sphi 0, %s50
      %s52 = sphi 0, %s50
      %s53 = sphi 0, %s52
      %s67 = sphi 0, %s53
      %s71 = sphi 0, %s71
      %s73 = sphi 0, %s71
      %s74 = sphi 0, %s73
      %s88 = sphi 0, %s74
      %s94 = sphi 0, %s96
      %s97 = sphi 0, %s94
      %s98 = sphi 0, %s97
      %s114 = sphi 0, %s98
    $region4: #{tpu_custom_call.1} parent=1 // loop_header_branch
      %19 = sbr.rel (%p17) target = $region8
    $region5: #{tpu_custom_call.1} parent=1 // loop_body
      %s21 = ssub.s32 %s16, 1
      %s22 = ssub.s32 %s16, 2
      %s23 = sadd.s32 %s16, 1
      %s24 = ssub.s32 %s16, %s23
      %p25 = scmp.eq.s32.totalorder %s24, 0
      %s27 = sadd.s32 %s26, 1
      %s28 = scalar_select %p25, %s26, %s27
      %p31 = pneg %p25
      %p32 = scmp.eq.s32.totalorder %s16, 1
      %p33 = por %p31, %p32
      %p34 = scmp.ne.s32.totalorder %s26, %s29
      %p35 = scmp.eq.s32.totalorder %s16, 0
      %p36 = por %p34, %p35
      %p37 = scmp.ne.s32.totalorder %s26, %s29
      %p38 = scmp.eq.s32.totalorder %s21, 1
      %p39 = por %p37, %p38
      %p40 = scmp.ne.s32.totalorder %s29, %s30
      %p41 = scmp.eq.s32.totalorder %s21, 0
      %p42 = por %p40, %p41
      %p43 = scmp.ne.s32.totalorder %s29, %s30
      %p44 = scmp.eq.s32.totalorder %s22, 1
      %p45 = por %p43, %p44
      %p47 = scmp.ne.s32.totalorder %s30, %s46
      %p48 = scmp.eq.s32.totalorder %s22, 0
      %p49 = por %p47, %p48
      %s51 = sadd.s32 %s50, 1
      %p54 = scmp.eq.s32.totalorder %s16, 1
      %p55 = scmp.ne.s32.totalorder %s50, %s52
      %p56 = scmp.eq.s32.totalorder %s16, 0
      %p57 = por %p55, %p56
      %p58 = scmp.ne.s32.totalorder %s50, %s52
      %p59 = scmp.eq.s32.totalorder %s21, 1
      %p60 = por %p58, %p59
      %p61 = scmp.ne.s32.totalorder %s52, %s53
      %p62 = scmp.eq.s32.totalorder %s21, 0
      %p63 = por %p61, %p62
      %p64 = scmp.ne.s32.totalorder %s52, %s53
      %p65 = scmp.eq.s32.totalorder %s22, 1
      %p66 = por %p64, %p65
      %p68 = scmp.ne.s32.totalorder %s53, %s67
      %p69 = scmp.eq.s32.totalorder %s22, 0
      %p70 = por %p68, %p69
      %s72 = sadd.s32 %s71, 1
      %p75 = scmp.eq.s32.totalorder %s16, 1
      %p76 = scmp.ne.s32.totalorder %s71, %s73
      %p77 = scmp.eq.s32.totalorder %s16, 0
      %p78 = por %p76, %p77
      %p79 = scmp.ne.s32.totalorder %s71, %s73
      %p80 = scmp.eq.s32.totalorder %s21, 1
      %p81 = por %p79, %p80
      %p82 = scmp.ne.s32.totalorder %s73, %s74
      %p83 = scmp.eq.s32.totalorder %s21, 0
      %p84 = por %p82, %p83
      %p85 = scmp.ne.s32.totalorder %s73, %s74
      %p86 = scmp.eq.s32.totalorder %s22, 1
      %p87 = por %p85, %p86
      %p89 = scmp.ne.s32.totalorder %s74, %s88
      %p90 = scmp.eq.s32.totalorder %s22, 0
      %p91 = por %p89, %p90
      %s92 = ssub.s32 %s16, %s23
      %p93 = scmp.eq.s32.totalorder %s92, 0
      %s95 = sadd.s32 %s94, 1
      %s96 = scalar_select %p93, %s94, %s95
      %p99 = pneg %p93
      %p100 = scmp.eq.s32.totalorder %s16, 1
      %p101 = por %p99, %p100
      %p102 = scmp.ne.s32.totalorder %s94, %s97
      %p103 = scmp.eq.s32.totalorder %s16, 0
      %p104 = por %p102, %p103
      %p105 = scmp.ne.s32.totalorder %s94, %s97
      %p106 = scmp.eq.s32.totalorder %s21, 1
      %p107 = por %p105, %p106
      %p108 = scmp.ne.s32.totalorder %s97, %s98
      %p109 = scmp.eq.s32.totalorder %s21, 0
      %p110 = por %p108, %p109
      %p111 = scmp.ne.s32.totalorder %s97, %s98
      %p112 = scmp.eq.s32.totalorder %s22, 1
      %p113 = por %p111, %p112
      %p115 = scmp.ne.s32.totalorder %s98, %s114
      %p116 = scmp.eq.s32.totalorder %s22, 0
      %p117 = por %p115, %p116
      %p118 = scmp.le.s32.totalorder 1, %s16
      %p119 = scmp.lt.s32.totalorder %s16, 3
      %p120 = pnand %p118, %p119
      %p121 = pneg %p120
      // Predicated region
      $region9: #{tpu_custom_call.1} parent=5 // pred_check
        _
      $region10: #{tpu_custom_call.1} parent=5 // pred_check_branch
        %123 = sbr.rel (%p120) target = $region12
      $region11: #{tpu_custom_call.1} parent=5 // pred_region
        %s124 = ssub.s32 %s16, 1
        // Predicated region
        $region13: #{tpu_custom_call.1} parent=11 // pred_check
          %p125 = pneg %p63
        $region14: #{tpu_custom_call.1} parent=11 // pred_check_branch
          %127 = sbr.rel (%p125) target = $region16
        $region15: #{tpu_custom_call.1} parent=11 // pred_region
          %s129 = ssub.s32 6272, 6272
          %130 = vsyncadd [#allocation6], %s129
          %s131 = sshll.u32 [#allocation5], 4
          %s132 = int_to_ptr.vmem [resolvable:$true] %s131
          %137 = dma.hbm_to_vmem [thread:$0]  %s1, 6272, %s132, [#allocation6], 64, 64, 4
        $region16: #{tpu_custom_call.1} parent=11 // pred_fallthru
          _
        // Predicated region
        $region17: #{tpu_custom_call.1} parent=11 // pred_check
          %p138 = pneg %p84
        $region18: #{tpu_custom_call.1} parent=11 // pred_check_branch
          %140 = sbr.rel (%p138) target = $region20
        $region19: #{tpu_custom_call.1} parent=11 // pred_region
          _
        $region20: #{tpu_custom_call.1} parent=11 // pred_fallthru
          _
      $region12: #{tpu_custom_call.1} parent=5 // pred_fallthru
        _
      %p141 = scmp.lt.s32.totalorder %s16, 2
      // Predicated region
      $region21: #{tpu_custom_call.1} parent=5 // pred_check
        %p142 = pneg %p141
      $region22: #{tpu_custom_call.1} parent=5 // pred_check_branch
        %144 = sbr.rel (%p142) target = $region24
      $region23: #{tpu_custom_call.1} parent=5 // pred_region
        // Predicated region
        $region25: #{tpu_custom_call.1} parent=23 // pred_check
          %p145 = pneg %p36
        $region26: #{tpu_custom_call.1} parent=23 // pred_check_branch
          %147 = sbr.rel (%p145) target = $region28
        $region27: #{tpu_custom_call.1} parent=23 // pred_region
          %s148 = sand.u32 %s26, 1
          %s149 = scalar_lea.sflag [#allocation3], %s148
          %s150 = sand.u32 %s26, 1
          %s151 = smul.addr %s150, 224
          %s152 = scalar_lea.vmem [#allocation2], %s151
          %s153 = smul.u32 4, %s16
          %s154 = ssub.s32 5, %s153
          %p155 = scmp.lt.s32.totalorder %s154, 4
          %s156 = scalar_select %p155, %s154, 4
          %s157 = smul.u32 128, %s156
          %s158 = smul.u32 %s157, 7
          %s160 = ssub.s32 3584, %s158
          %161 = vsyncadd %s149, %s160
          %p162 = scmp.ne.s32.totalorder 0, %s158
          %s163 = smul.addr %s153, 7
          %s164 = smul.addr %s163, 128
          %s165 = scalar_lea.hbm %s0, %s164
          %s166 = smul.u32 56, %s156
          %s167 = sshll.u32 %s152, 4
          %s168 = int_to_ptr.vmem [resolvable:$true] %s167
          %s169 = sshll.u32 %s166, 4
          %173 = dma.hbm_to_vmem [thread:$0]  (%p162), %s165, %s169, %s168, %s149, 896, 896, 56
        $region28: #{tpu_custom_call.1} parent=23 // pred_fallthru
          _
      $region24: #{tpu_custom_call.1} parent=5 // pred_fallthru
        _
      %p174 = scmp.le.s32.totalorder 1, %s16
      %p175 = scmp.lt.s32.totalorder %s16, 3
      %p176 = pnand %p174, %p175
      %p177 = pneg %p176
      // Predicated region
      $region29: #{tpu_custom_call.1} parent=5 // pred_check
        _
      $region30: #{tpu_custom_call.1} parent=5 // pred_check_branch
        %179 = sbr.rel (%p176) target = $region32
      $region31: #{tpu_custom_call.1} parent=5 // pred_region
        %s180 = ssub.s32 %s16, 1
        %s181 = sand.u32 %s29, 1
        %s182 = scalar_lea.sflag [#allocation3], %s181
        %s183 = sand.u32 %s29, 1
        %s184 = smul.addr %s183, 224
        %s185 = scalar_lea.vmem [#allocation2], %s184
        // Predicated region
        $region33: #{tpu_custom_call.1} parent=31 // pred_check
          %p186 = pneg %p42
        $region34: #{tpu_custom_call.1} parent=31 // pred_check_branch
          %188 = sbr.rel (%p186) target = $region36
        $region35: #{tpu_custom_call.1} parent=31 // pred_region
          %189 = dma.done %s182, 3584
        $region36: #{tpu_custom_call.1} parent=31 // pred_fallthru
          _
        // Predicated region
        $region37: #{tpu_custom_call.1} parent=31 // pred_check
          %p190 = pneg %p63
        $region38: #{tpu_custom_call.1} parent=31 // pred_check_branch
          %192 = sbr.rel (%p190) target = $region40
        $region39: #{tpu_custom_call.1} parent=31 // pred_region
          %193 = dma.done [#allocation6], 6272
        $region40: #{tpu_custom_call.1} parent=31 // pred_fallthru
          _
        %s194 = sand.u32 %s29, 1
        %s195 = scalar_lea.sflag [#allocation3], %s194
        %s196 = sand.u32 %s29, 1
        %s197 = smul.addr %s196, 224
        %s198 = scalar_lea.vmem [#allocation2], %s197
        %p199 = pneg %p42
        %p200 = pneg %p39
        %p201 = pneg %p63
        %p202 = pneg %p60
        %p203 = pneg %p84
        %p204 = pneg %p81
        %p205 = pneg %p110
        %p206 = pneg %p107
        %s207 = sand.u32 %s97, 1
        %s208 = scalar_lea.sflag [#allocation4], %s207
        %s209 = sand.u32 %s97, 1
        %s210 = smul.addr %s209, 16
        %s211 = scalar_lea.vmem [#allocation7], %s210
        %s212 = smul.u32 4, %s21
        %s213 = ssub.s32 5, %s212
        %p214 = scmp.lt.s32.totalorder %s213, 4
        %s215 = scalar_select %p214, %s213, 4
        %s216 = smul.u32 128, %s215
        %s217 = smul.u32 %s216, 7
        %s218 = smul.u32 4, %s21
        %s219 = ssub.s32 5, %s218
        %p220 = scmp.lt.s32.totalorder %s219, 4
        %s221 = scalar_select %p220, %s219, 4
        %s222 = smul.u32 64, %s221
        %v224 = vld [vmem:[%s185] sm:$0xff]
        %v225 = vld [vmem:[%s185 + $0x8] sm:$0xff]
        %v226 = vld [vmem:[%s185 + $0x10] sm:$0xff]
        %v227 = vld [vmem:[%s185 + $0x18] sm:$0xff]
        %v228 = vld [vmem:[%s185 + $0x20] sm:$0xff]
        %v229 = vld [vmem:[%s185 + $0x28] sm:$0xff]
        %v230 = vld [vmem:[%s185 + $0x30] sm:$0xff]
        %v231 = vld [vmem:[%s185 + $0x38] sm:$0xff]
        %v232 = vld [vmem:[%s185 + $0x40] sm:$0xff]
        %v233 = vld [vmem:[%s185 + $0x48] sm:$0xff]
        %v234 = vld [vmem:[%s185 + $0x50] sm:$0xff]
        %v235 = vld [vmem:[%s185 + $0x58] sm:$0xff]
        %v236 = vld [vmem:[%s185 + $0x60] sm:$0xff]
        %v237 = vld [vmem:[%s185 + $0x68] sm:$0xff]
        %v238 = vld [vmem:[%s185 + $0x70] sm:$0xff]
        %v239 = vld [vmem:[%s185 + $0x78] sm:$0xff]
        %v240 = vld [vmem:[%s185 + $0x80] sm:$0xff]
        %v241 = vld [vmem:[%s185 + $0x88] sm:$0xff]
        %v242 = vld [vmem:[%s185 + $0x90] sm:$0xff]
        %v243 = vld [vmem:[%s185 + $0x98] sm:$0xff]
        %v244 = vld [vmem:[%s185 + $0xa0] sm:$0xff]
        %v245 = vld [vmem:[%s185 + $0xa8] sm:$0xff]
        %v246 = vld [vmem:[%s185 + $0xb0] sm:$0xff]
        %v247 = vld [vmem:[%s185 + $0xb8] sm:$0xff]
        %v248 = vld [vmem:[%s185 + $0xc0] sm:$0xff]
        %v249 = vld [vmem:[%s185 + $0xc8] sm:$0xff]
        %v250 = vld [vmem:[%s185 + $0xd0] sm:$0xff]
        %v251 = vld [vmem:[%s185 + $0xd8] sm:$0xff]
        %v252 = vpack.c.bf16 %v231, %v224
        %v253 = vpack.c.bf16 %v232, %v225
        %v254 = vpack.c.bf16 %v233, %v226
        %v255 = vpack.c.bf16 %v234, %v227
        %v256 = vpack.c.bf16 %v235, %v228
        %v257 = vpack.c.bf16 %v236, %v229
        %v258 = vpack.c.bf16 %v237, %v230
        %v259 = vpack.c.bf16 %v245, %v238
        %v260 = vpack.c.bf16 %v246, %v239
        %v261 = vpack.c.bf16 %v247, %v240
        %v262 = vpack.c.bf16 %v248, %v241
        %v263 = vpack.c.bf16 %v249, %v242
        %v264 = vpack.c.bf16 %v250, %v243
        %v265 = vpack.c.bf16 %v251, %v244
        %v266 = vld [vmem:[#allocation5] sm:$0xf]
        %v267 = vld [vmem:[#allocation5 + $0x4] sm:$0xf]
        %v268 = vld [vmem:[#allocation5 + $0x8] sm:$0xf]
        %v269 = vld [vmem:[#allocation5 + $0xc] sm:$0xf]
        %v270 = vld [vmem:[#allocation5 + $0x10] sm:$0xf]
        %v271 = vld [vmem:[#allocation5 + $0x14] sm:$0xf]
        %v272 = vld [vmem:[#allocation5 + $0x18] sm:$0xf]
        %v273 = vld [vmem:[#allocation5 + $0x1c] sm:$0xf]
        %v274 = vld [vmem:[#allocation5 + $0x20] sm:$0xf]
        %v275 = vld [vmem:[#allocation5 + $0x24] sm:$0xf]
        %v276 = vld [vmem:[#allocation5 + $0x28] sm:$0xf]
        %v277 = vld [vmem:[#allocation5 + $0x2c] sm:$0xf]
        %v278 = vld [vmem:[#allocation5 + $0x30] sm:$0xf]
        %v279 = vld [vmem:[#allocation5 + $0x34] sm:$0xf]
        %v280 = vld [vmem:[#allocation5 + $0x38] sm:$0xf]
        %v281 = vld [vmem:[#allocation5 + $0x3c] sm:$0xf]
        %v282 = vld [vmem:[#allocation5 + $0x40] sm:$0xf]
        %v283 = vld [vmem:[#allocation5 + $0x44] sm:$0xf]
        %v284 = vld [vmem:[#allocation5 + $0x48] sm:$0xf]
        %v285 = vld [vmem:[#allocation5 + $0x4c] sm:$0xf]
        %v286 = vld [vmem:[#allocation5 + $0x50] sm:$0xf]
        %v287 = vld [vmem:[#allocation5 + $0x54] sm:$0xf]
        %v288 = vld [vmem:[#allocation5 + $0x58] sm:$0xf]
        %v289 = vld [vmem:[#allocation5 + $0x5c] sm:$0xf]
        %v290 = vld [vmem:[#allocation5 + $0x60] sm:$0xf]
        %v291 = vld [vmem:[#allocation5 + $0x64] sm:$0xf]
        %v292 = vld [vmem:[#allocation5 + $0x68] sm:$0xf]
        %v293 = vld [vmem:[#allocation5 + $0x6c] sm:$0xf]
        %v294 = vld [vmem:[#allocation5 + $0x70] sm:$0xf]
        %v295 = vld [vmem:[#allocation5 + $0x74] sm:$0xf]
        %v296 = vld [vmem:[#allocation5 + $0x78] sm:$0xf]
        %v297 = vld [vmem:[#allocation5 + $0x7c] sm:$0xf]
        %v298 = vld [vmem:[#allocation5 + $0x80] sm:$0xf]
        %v299 = vld [vmem:[#allocation5 + $0x84] sm:$0xf]
        %v300 = vld [vmem:[#allocation5 + $0x88] sm:$0xf]
        %v301 = vld [vmem:[#allocation5 + $0x8c] sm:$0xf]
        %v302 = vld [vmem:[#allocation5 + $0x90] sm:$0xf]
        %v303 = vld [vmem:[#allocation5 + $0x94] sm:$0xf]
        %v304 = vld [vmem:[#allocation5 + $0x98] sm:$0xf]
        %v305 = vld [vmem:[#allocation5 + $0x9c] sm:$0xf]
        %v306 = vld [vmem:[#allocation5 + $0xa0] sm:$0xf]
        %v307 = vld [vmem:[#allocation5 + $0xa4] sm:$0xf]
        %v308 = vld [vmem:[#allocation5 + $0xa8] sm:$0xf]
        %v309 = vld [vmem:[#allocation5 + $0xac] sm:$0xf]
        %v310 = vld [vmem:[#allocation5 + $0xb0] sm:$0xf]
        %v311 = vld [vmem:[#allocation5 + $0xb4] sm:$0xf]
        %v312 = vld [vmem:[#allocation5 + $0xb8] sm:$0xf]
        %v313 = vld [vmem:[#allocation5 + $0xbc] sm:$0xf]
        %v314 = vld [vmem:[#allocation5 + $0xc0] sm:$0xf]
        %v315 = vld [vmem:[#allocation5 + $0xc4] sm:$0xf]
        %v316 = vld [vmem:[#allocation5 + $0xc8] sm:$0xf]
        %v317 = vld [vmem:[#allocation5 + $0xcc] sm:$0xf]
        %v318 = vld [vmem:[#allocation5 + $0xd0] sm:$0xf]
        %v319 = vld [vmem:[#allocation5 + $0xd4] sm:$0xf]
        %v320 = vld [vmem:[#allocation5 + $0xd8] sm:$0xf]
        %v321 = vld [vmem:[#allocation5 + $0xdc] sm:$0xf]
        %v322 = vld [vmem:[#allocation5 + $0xe0] sm:$0xf]
        %v323 = vld [vmem:[#allocation5 + $0xe4] sm:$0xf]
        %v324 = vld [vmem:[#allocation5 + $0xe8] sm:$0xf]
        %v325 = vld [vmem:[#allocation5 + $0xec] sm:$0xf]
        %v326 = vld [vmem:[#allocation5 + $0xf0] sm:$0xf]
        %v327 = vld [vmem:[#allocation5 + $0xf4] sm:$0xf]
        %v328 = vld [vmem:[#allocation5 + $0xf8] sm:$0xf]
        %v329 = vld [vmem:[#allocation5 + $0xfc] sm:$0xf]
        %v330 = vld [vmem:[#allocation5 + $0x100] sm:$0xf]
        %v331 = vld [vmem:[#allocation5 + $0x104] sm:$0xf]
        %v332 = vld [vmem:[#allocation5 + $0x108] sm:$0xf]
        %v333 = vld [vmem:[#allocation5 + $0x10c] sm:$0xf]
        %v334 = vld [vmem:[#allocation5 + $0x110] sm:$0xf]
        %v335 = vld [vmem:[#allocation5 + $0x114] sm:$0xf]
        %v336 = vld [vmem:[#allocation5 + $0x118] sm:$0xf]
        %v337 = vld [vmem:[#allocation5 + $0x11c] sm:$0xf]
        %v338 = vld [vmem:[#allocation5 + $0x120] sm:$0xf]
        %v339 = vld [vmem:[#allocation5 + $0x124] sm:$0xf]
        %v340 = vld [vmem:[#allocation5 + $0x128] sm:$0xf]
        %v341 = vld [vmem:[#allocation5 + $0x12c] sm:$0xf]
        %v342 = vld [vmem:[#allocation5 + $0x130] sm:$0xf]
        %v343 = vld [vmem:[#allocation5 + $0x134] sm:$0xf]
        %v344 = vld [vmem:[#allocation5 + $0x138] sm:$0xf]
        %v345 = vld [vmem:[#allocation5 + $0x13c] sm:$0xf]
        %v346 = vld [vmem:[#allocation5 + $0x140] sm:$0xf]
        %v347 = vld [vmem:[#allocation5 + $0x144] sm:$0xf]
        %v348 = vld [vmem:[#allocation5 + $0x148] sm:$0xf]
        %v349 = vld [vmem:[#allocation5 + $0x14c] sm:$0xf]
        %v350 = vld [vmem:[#allocation5 + $0x150] sm:$0xf]
        %v351 = vld [vmem:[#allocation5 + $0x154] sm:$0xf]
        %v352 = vld [vmem:[#allocation5 + $0x158] sm:$0xf]
        %v353 = vld [vmem:[#allocation5 + $0x15c] sm:$0xf]
        %v354 = vld [vmem:[#allocation5 + $0x160] sm:$0xf]
        %v355 = vld [vmem:[#allocation5 + $0x164] sm:$0xf]
        %v356 = vld [vmem:[#allocation5 + $0x168] sm:$0xf]
        %v357 = vld [vmem:[#allocation5 + $0x16c] sm:$0xf]
        %v358 = vld [vmem:[#allocation5 + $0x170] sm:$0xf]
        %v359 = vld [vmem:[#allocation5 + $0x174] sm:$0xf]
        %v360 = vld [vmem:[#allocation5 + $0x178] sm:$0xf]
        %v361 = vld [vmem:[#allocation5 + $0x17c] sm:$0xf]
        %v362 = vld [vmem:[#allocation5 + $0x180] sm:$0xf]
        %v363 = vld [vmem:[#allocation5 + $0x184] sm:$0xf]
        %v364 = vld [vmem:[%s2] sm:$0x1]
        %v366 = vlaneseq
        %v367 = vshrl.u32 %v366, 7
        %v368 = vsub.s32 0, %v367
        %v369 = vrot.slane %v364, %v368
        %v469 = vunpack.c.l.b16 %v266
        %v470 = vunpack.c.l.b16 %v267
        %v471 = vunpack.c.l.b16 %v268
        %v472 = vunpack.c.l.b16 %v269
        %v473 = vunpack.c.l.b16 %v270
        %v474 = vunpack.c.l.b16 %v271
        %v475 = vunpack.c.l.b16 %v272
        %v476 = vunpack.c.l.b16 %v273
        %v477 = vunpack.c.l.b16 %v274
        %v478 = vunpack.c.l.b16 %v275
        %v479 = vunpack.c.l.b16 %v276
        %v480 = vunpack.c.l.b16 %v277
        %v481 = vunpack.c.l.b16 %v278
        %v482 = vunpack.c.l.b16 %v279
        %v483 = vunpack.c.l.b16 %v280
        %v484 = vunpack.c.l.b16 %v281
        %v485 = vunpack.c.l.b16 %v282
        %v486 = vunpack.c.l.b16 %v283
        %v487 = vunpack.c.l.b16 %v284
        %v488 = vunpack.c.l.b16 %v285
        %v489 = vunpack.c.l.b16 %v286
        %v490 = vunpack.c.l.b16 %v287
        %v491 = vunpack.c.l.b16 %v288
        %v492 = vunpack.c.l.b16 %v289
        %v493 = vunpack.c.l.b16 %v290
        %v494 = vunpack.c.l.b16 %v291
        %v495 = vunpack.c.l.b16 %v292
        %v496 = vunpack.c.l.b16 %v293
        %v497 = vunpack.c.l.b16 %v294
        %v498 = vunpack.c.l.b16 %v295
        %v499 = vunpack.c.l.b16 %v296
        %v500 = vunpack.c.l.b16 %v297
        %v501 = vunpack.c.l.b16 %v298
        %v502 = vunpack.c.l.b16 %v299
        %v503 = vunpack.c.l.b16 %v300
        %v504 = vunpack.c.l.b16 %v301
        %v505 = vunpack.c.l.b16 %v302
        %v506 = vunpack.c.l.b16 %v303
        %v507 = vunpack.c.l.b16 %v304
        %v508 = vunpack.c.l.b16 %v305
        %v509 = vunpack.c.l.b16 %v306
        %v510 = vunpack.c.l.b16 %v307
        %v511 = vunpack.c.l.b16 %v308
        %v512 = vunpack.c.l.b16 %v309
        %v513 = vunpack.c.l.b16 %v310
        %v514 = vunpack.c.l.b16 %v311
        %v515 = vunpack.c.l.b16 %v312
        %v516 = vunpack.c.l.b16 %v313
        %v517 = vunpack.c.l.b16 %v314
        %v518 = vunpack.c.l.b16 %v315
        %v519 = vunpack.c.l.b16 %v316
        %v520 = vunpack.c.l.b16 %v317
        %v521 = vunpack.c.l.b16 %v318
        %v522 = vunpack.c.l.b16 %v319
        %v523 = vunpack.c.l.b16 %v320
        %v524 = vunpack.c.l.b16 %v321
        %v525 = vunpack.c.l.b16 %v322
        %v526 = vunpack.c.l.b16 %v323
        %v527 = vunpack.c.l.b16 %v324
        %v528 = vunpack.c.l.b16 %v325
        %v529 = vunpack.c.l.b16 %v326
        %v530 = vunpack.c.l.b16 %v327
        %v531 = vunpack.c.l.b16 %v328
        %v532 = vunpack.c.l.b16 %v329
        %v533 = vunpack.c.l.b16 %v330
        %v534 = vunpack.c.l.b16 %v331
        %v535 = vunpack.c.l.b16 %v332
        %v536 = vunpack.c.l.b16 %v333
        %v537 = vunpack.c.l.b16 %v334
        %v538 = vunpack.c.l.b16 %v335
        %v539 = vunpack.c.l.b16 %v336
        %v540 = vunpack.c.l.b16 %v337
        %v541 = vunpack.c.l.b16 %v338
        %v542 = vunpack.c.l.b16 %v339
        %v543 = vunpack.c.l.b16 %v340
        %v544 = vunpack.c.l.b16 %v341
        %v545 = vunpack.c.l.b16 %v342
        %v546 = vunpack.c.l.b16 %v343
        %v547 = vunpack.c.l.b16 %v344
        %v548 = vunpack.c.l.b16 %v345
        %v549 = vunpack.c.l.b16 %v346
        %v550 = vunpack.c.l.b16 %v347
        %v551 = vunpack.c.l.b16 %v348
        %v552 = vunpack.c.l.b16 %v349
        %v553 = vunpack.c.l.b16 %v350
        %v554 = vunpack.c.l.b16 %v351
        %v555 = vunpack.c.l.b16 %v352
        %v556 = vunpack.c.l.b16 %v353
        %v557 = vunpack.c.l.b16 %v354
        %v558 = vunpack.c.l.b16 %v355
        %v559 = vunpack.c.l.b16 %v356
        %v560 = vunpack.c.l.b16 %v357
        %v561 = vunpack.c.l.b16 %v358
        %v562 = vunpack.c.l.b16 %v359
        %v563 = vunpack.c.l.b16 %v360
        %v564 = vunpack.c.l.b16 %v361
        %v565 = vunpack.c.l.b16 %v362
        %v566 = vunpack.c.l.b16 %v363
        %v567 = vpack.c.b16 %v470, %v469
        %v568 = vpack.c.b16 %v472, %v471
        %v569 = vpack.c.b16 %v474, %v473
        %v570 = vpack.c.b16 %v476, %v475
        %v571 = vpack.c.b16 %v478, %v477
        %v572 = vpack.c.b16 %v480, %v479
        %v573 = vpack.c.b16 %v482, %v481
        %v574 = vpack.c.b16 %v484, %v483
        %v575 = vpack.c.b16 %v486, %v485
        %v576 = vpack.c.b16 %v488, %v487
        %v577 = vpack.c.b16 %v490, %v489
        %v578 = vpack.c.b16 %v492, %v491
        %v579 = vpack.c.b16 %v494, %v493
        %v580 = vpack.c.b16 %v496, %v495
        %v581 = vpack.c.b16 %v498, %v497
        %v582 = vpack.c.b16 %v500, %v499
        %v583 = vpack.c.b16 %v502, %v501
        %v584 = vpack.c.b16 %v504, %v503
        %v585 = vpack.c.b16 %v506, %v505
        %v586 = vpack.c.b16 %v508, %v507
        %v587 = vpack.c.b16 %v510, %v509
        %v588 = vpack.c.b16 %v512, %v511
        %v589 = vpack.c.b16 %v514, %v513
        %v590 = vpack.c.b16 %v516, %v515
        %v591 = vpack.c.b16 %v518, %v517
        %v592 = vpack.c.b16 %v520, %v519
        %v593 = vpack.c.b16 %v522, %v521
        %v594 = vpack.c.b16 %v524, %v523
        %v595 = vpack.c.b16 %v526, %v525
        %v596 = vpack.c.b16 %v528, %v527
        %v597 = vpack.c.b16 %v530, %v529
        %v598 = vpack.c.b16 %v532, %v531
        %v599 = vpack.c.b16 %v534, %v533
        %v600 = vpack.c.b16 %v536, %v535
        %v601 = vpack.c.b16 %v538, %v537
        %v602 = vpack.c.b16 %v540, %v539
        %v603 = vpack.c.b16 %v542, %v541
        %v604 = vpack.c.b16 %v544, %v543
        %v605 = vpack.c.b16 %v546, %v545
        %v606 = vpack.c.b16 %v548, %v547
        %v607 = vpack.c.b16 %v550, %v549
        %v608 = vpack.c.b16 %v552, %v551
        %v609 = vpack.c.b16 %v554, %v553
        %v610 = vpack.c.b16 %v556, %v555
        %v611 = vpack.c.b16 %v558, %v557
        %v612 = vpack.c.b16 %v560, %v559
        %v613 = vpack.c.b16 %v562, %v561
        %v614 = vpack.c.b16 %v564, %v563
        %v615 = vpack.c.b16 %v566, %v565
        %vm665 = vcmask 130048
        %v667 = vsel %vm665, %v258, 0
        %v670 = vsel %vm665, %v265, 0
        %672 = vmatprep.subr.bf16.mxu0 0
        %673 = vmatpush1.bf16.msra.mxu0 %v567
        %674 = vmatprep.subr.bf16.mxu0 0
        %675 = vmatpush1.bf16.msra.mxu0 %v568
        %676 = vmatprep.subr.bf16.mxu0 0
        %677 = vmatpush1.bf16.msra.mxu0 %v569
        %678 = vmatprep.subr.bf16.mxu0 0
        %679 = vmatpush1.bf16.msra.mxu0 %v570
        %680 = vmatprep.subr.bf16.mxu0 0
        %681 = vmatpush1.bf16.msra.mxu0 %v571
        %682 = vmatprep.subr.bf16.mxu0 0
        %683 = vmatpush1.bf16.msra.mxu0 %v572
        %684 = vmatprep.subr.bf16.mxu0 0
        %685 = vmatpush1.bf16.msra.mxu0 %v573
        %686 = vmatprep.subr.bf16.mxu0 0
        %687 = vmatpush1.bf16.msra.mxu0 %v574
        %688 = vmatprep.subr.bf16.mxu0 0
        %689 = vmatpush1.bf16.msra.mxu0 %v575
        %690 = vmatprep.subr.bf16.mxu0 0
        %691 = vmatpush1.bf16.msra.mxu0 %v576
        %692 = vmatprep.subr.bf16.mxu0 0
        %693 = vmatpush1.bf16.msra.mxu0 %v577
        %694 = vmatprep.subr.bf16.mxu0 0
        %695 = vmatpush1.bf16.msra.mxu0 %v578
        %696 = vmatprep.subr.bf16.mxu0 0
        %697 = vmatpush1.bf16.msra.mxu0 %v579
        %698 = vmatprep.subr.bf16.mxu0 0
        %699 = vmatpush1.bf16.msra.mxu0 %v580
        %700 = vmatprep.subr.bf16.mxu0 0
        %701 = vmatpush1.bf16.msra.mxu0 %v581
        %702 = vmatprep.subr.bf16.mxu0 0
        %703 = vmatpush1.bf16.msra.mxu0 %v582
        %704 = vmatprep.mubr.bf16.mxu0 %v253
        %705 = vmatmul.mubr.bf16.gmra.mrb[0].mxu0 %v252
        %v706 = vpop.f32.mrb[0].mxu0
        %v707 = vadd.f32 %v369, %v706
        %v708 = vpop.f32.mrb[0].mxu0
        %v709 = vpop.f32.mrb[0].mxu0
        %v710 = vadd.f32 %v369, %v709
        %v711 = vpop.f32.mrb[0].mxu0
        %712 = vmatprep.mubr.bf16.mxu0 %v260
        %713 = vmatmul.mubr.bf16.gmra.mrb[0].mxu0 %v259
        %v714 = vpop.f32.mrb[0].mxu0
        %v715 = vadd.f32 %v369, %v714
        %v716 = vpop.f32.mrb[0].mxu0
        %v717 = vpop.f32.mrb[0].mxu0
        %v718 = vadd.f32 %v369, %v717
        %v719 = vpop.f32.mrb[0].mxu0
        %720 = vdwg.mxu0
        %721 = vmatprep.subr.bf16.mxu0 0
        %722 = vmatpush1.bf16.msra.mxu0 %v583
        %723 = vmatprep.subr.bf16.mxu0 0
        %724 = vmatpush1.bf16.msra.mxu0 %v584
        %725 = vmatprep.subr.bf16.mxu0 0
        %726 = vmatpush1.bf16.msra.mxu0 %v585
        %727 = vmatprep.subr.bf16.mxu0 0
        %728 = vmatpush1.bf16.msra.mxu0 %v586
        %729 = vmatprep.subr.bf16.mxu0 0
        %730 = vmatpush1.bf16.msra.mxu0 %v587
        %731 = vmatprep.subr.bf16.mxu0 0
        %732 = vmatpush1.bf16.msra.mxu0 %v588
        %733 = vmatprep.subr.bf16.mxu0 0
        %734 = vmatpush1.bf16.msra.mxu0 %v589
        %735 = vmatprep.subr.bf16.mxu0 0
        %736 = vmatpush1.bf16.msra.mxu0 %v590
        %737 = vmatprep.subr.bf16.mxu0 0
        %738 = vmatpush1.bf16.msra.mxu0 %v591
        %739 = vmatprep.subr.bf16.mxu0 0
        %740 = vmatpush1.bf16.msra.mxu0 %v592
        %741 = vmatprep.subr.bf16.mxu0 0
        %742 = vmatpush1.bf16.msra.mxu0 %v593
        %743 = vmatprep.subr.bf16.mxu0 0
        %744 = vmatpush1.bf16.msra.mxu0 %v594
        %745 = vmatprep.subr.bf16.mxu0 0
        %746 = vmatpush1.bf16.msra.mxu0 %v595
        %747 = vmatprep.subr.bf16.mxu0 0
        %748 = vmatpush1.bf16.msra.mxu0 %v596
        %749 = vmatprep.subr.bf16.mxu0 0
        %750 = vmatpush1.bf16.msra.mxu0 %v597
        %751 = vmatprep.subr.bf16.mxu0 0
        %752 = vmatpush1.bf16.msra.mxu0 %v598
        %753 = vmatprep.mubr.bf16.mxu0 %v255
        %754 = vmatmul.mubr.bf16.gmra.mrb[0].mxu0 %v254
        %v755 = vpop.f32.mrb[0].mxu0
        %v756 = vadd.f32 %v707, %v755
        %v757 = vpop.f32.mrb[0].mxu0
        %v758 = vpop.f32.mrb[0].mxu0
        %v759 = vadd.f32 %v710, %v758
        %v760 = vpop.f32.mrb[0].mxu0
        %761 = vmatprep.mubr.bf16.mxu0 %v262
        %762 = vmatmul.mubr.bf16.gmra.mrb[0].mxu0 %v261
        %v763 = vpop.f32.mrb[0].mxu0
        %v764 = vadd.f32 %v715, %v763
        %v765 = vpop.f32.mrb[0].mxu0
        %v766 = vpop.f32.mrb[0].mxu0
        %v767 = vadd.f32 %v718, %v766
        %v768 = vpop.f32.mrb[0].mxu0
        %769 = vdwg.mxu0
        %770 = vmatprep.subr.bf16.mxu0 0
        %771 = vmatpush1.bf16.msra.mxu0 %v599
        %772 = vmatprep.subr.bf16.mxu0 0
        %773 = vmatpush1.bf16.msra.mxu0 %v600
        %774 = vmatprep.subr.bf16.mxu0 0
        %775 = vmatpush1.bf16.msra.mxu0 %v601
        %776 = vmatprep.subr.bf16.mxu0 0
        %777 = vmatpush1.bf16.msra.mxu0 %v602
        %778 = vmatprep.subr.bf16.mxu0 0
        %779 = vmatpush1.bf16.msra.mxu0 %v603
        %780 = vmatprep.subr.bf16.mxu0 0
        %781 = vmatpush1.bf16.msra.mxu0 %v604
        %782 = vmatprep.subr.bf16.mxu0 0
        %783 = vmatpush1.bf16.msra.mxu0 %v605
        %784 = vmatprep.subr.bf16.mxu0 0
        %785 = vmatpush1.bf16.msra.mxu0 %v606
        %786 = vmatprep.subr.bf16.mxu0 0
        %787 = vmatpush1.bf16.msra.mxu0 %v607
        %788 = vmatprep.subr.bf16.mxu0 0
        %789 = vmatpush1.bf16.msra.mxu0 %v608
        %790 = vmatprep.subr.bf16.mxu0 0
        %791 = vmatpush1.bf16.msra.mxu0 %v609
        %792 = vmatprep.subr.bf16.mxu0 0
        %793 = vmatpush1.bf16.msra.mxu0 %v610
        %794 = vmatprep.subr.bf16.mxu0 0
        %795 = vmatpush1.bf16.msra.mxu0 %v611
        %796 = vmatprep.subr.bf16.mxu0 0
        %797 = vmatpush1.bf16.msra.mxu0 %v612
        %798 = vmatprep.subr.bf16.mxu0 0
        %799 = vmatpush1.bf16.msra.mxu0 %v613
        %800 = vmatprep.subr.bf16.mxu0 0
        %801 = vmatpush1.bf16.msra.mxu0 %v614
        %802 = vmatprep.mubr.bf16.mxu0 %v257
        %803 = vmatmul.mubr.bf16.gmra.mrb[0].mxu0 %v256
        %v804 = vpop.f32.mrb[0].mxu0
        %v805 = vadd.f32 %v756, %v804
        %v806 = vpop.f32.mrb[0].mxu0
        %v807 = vpop.f32.mrb[0].mxu0
        %v808 = vadd.f32 %v759, %v807
        %v809 = vpop.f32.mrb[0].mxu0
        %810 = vmatprep.mubr.bf16.mxu0 %v264
        %811 = vmatmul.mubr.bf16.gmra.mrb[0].mxu0 %v263
        %v812 = vpop.f32.mrb[0].mxu0
        %v813 = vadd.f32 %v764, %v812
        %v814 = vpop.f32.mrb[0].mxu0
        %v815 = vpop.f32.mrb[0].mxu0
        %v816 = vadd.f32 %v767, %v815
        %v817 = vpop.f32.mrb[0].mxu0
        %818 = vdwg.mxu0
        %819 = vmatprep.subr.bf16.mxu0 0
        %820 = vmatpush1.bf16.msra.mxu0 %v615
        %821 = vmatprep.subr.bf16.mxu0 0
        %822 = vmatpush1.bf16.msra.mxu0 0
        %823 = vmatprep.subr.bf16.mxu0 0
        %824 = vmatpush1.bf16.msra.mxu0 0
        %825 = vmatprep.subr.bf16.mxu0 0
        %826 = vmatpush1.bf16.msra.mxu0 0
        %827 = vmatprep.subr.bf16.mxu0 0
        %828 = vmatpush1.bf16.msra.mxu0 0
        %829 = vmatprep.subr.bf16.mxu0 0
        %830 = vmatpush1.bf16.msra.mxu0 0
        %831 = vmatprep.subr.bf16.mxu0 0
        %832 = vmatpush1.bf16.msra.mxu0 0
        %833 = vmatprep.subr.bf16.mxu0 0
        %834 = vmatpush1.bf16.msra.mxu0 0
        %835 = vmatprep.subr.bf16.mxu0 0
        %836 = vmatpush1.bf16.msra.mxu0 0
        %837 = vmatprep.subr.bf16.mxu0 0
        %838 = vmatpush1.bf16.msra.mxu0 0
        %839 = vmatprep.subr.bf16.mxu0 0
        %840 = vmatpush1.bf16.msra.mxu0 0
        %841 = vmatprep.subr.bf16.mxu0 0
        %842 = vmatpush1.bf16.msra.mxu0 0
        %843 = vmatprep.subr.bf16.mxu0 0
        %844 = vmatpush1.bf16.msra.mxu0 0
        %845 = vmatprep.subr.bf16.mxu0 0
        %846 = vmatpush1.bf16.msra.mxu0 0
        %847 = vmatprep.subr.bf16.mxu0 0
        %848 = vmatpush1.bf16.msra.mxu0 0
        %849 = vmatprep.subr.bf16.mxu0 0
        %850 = vmatpush1.bf16.msra.mxu0 0
        %851 = vmatprep.mubr.bf16.mxu0 0
        %852 = vmatmul.mubr.bf16.gmra.mrb[0].mxu0 %v667
        %v853 = vpop.f32.mrb[0].mxu0
        %v854 = vadd.f32 %v805, %v853
        %v855 = vpop.f32.mrb[0].mxu0
        %v856 = vpop.f32.mrb[0].mxu0
        %v857 = vadd.f32 %v808, %v856
        %v858 = vpop.f32.mrb[0].mxu0
        %859 = vmatprep.mubr.bf16.mxu0 0
        %860 = vmatmul.mubr.bf16.gmra.mrb[0].mxu0 %v670
        %v861 = vpop.f32.mrb[0].mxu0
        %v862 = vadd.f32 %v813, %v861
        %v863 = vpop.f32.mrb[0].mxu0
        %v864 = vpop.f32.mrb[0].mxu0
        %v865 = vadd.f32 %v816, %v864
        %v866 = vpop.f32.mrb[0].mxu0
        %867 = vdwg.mxu0
        %v868 = vxor.u32 %v854, 2147483648
        %v869 = vxor.u32 %v857, 2147483648
        %v870 = vxor.u32 %v862, 2147483648
        %v871 = vxor.u32 %v865, 2147483648
        %v872 = vmul.f32 %v868, 1.442695
        %v873 = vpow.pop %v872
        %v874 = vmul.f32 %v869, 1.442695
        %v875 = vpow.pop %v874
        %v876 = vmul.f32 %v870, 1.442695
        %v877 = vpow.pop %v876
        %v878 = vmul.f32 %v871, 1.442695
        %v879 = vpow.pop %v878
        %v880 = vadd.f32 %v873, 1.0
        %v881 = vadd.f32 %v875, 1.0
        %v882 = vadd.f32 %v877, 1.0
        %v883 = vadd.f32 %v879, 1.0
        %v884 = vrcp.pop %v880
        %v885 = vmul.f32 1.0, %v884
        %v886 = vrcp.pop %v881
        %v887 = vmul.f32 1.0, %v886
        %v888 = vrcp.pop %v882
        %v889 = vmul.f32 1.0, %v888
        %v890 = vrcp.pop %v883
        %v891 = vmul.f32 1.0, %v890
        %v892 = vpack.c.bf16 %v887, %v885
        %v893 = vpack.c.bf16 %v891, %v889
        %v896 = vunpack.c.l.b16 %v892
        %v897 = vunpack.c.h.b16 %v892
        %v898 = vunpack.c.l.b16 %v893
        %v899 = vunpack.c.h.b16 %v893
        %v900 = vpack.c.b16 %v896, %v896
        %v901 = vpack.c.b16 %v897, %v897
        %v902 = vpack.c.b16 %v898, %v898
        %v903 = vpack.c.b16 %v899, %v899
        %908 = vst [vmem:[%s211] sm:$0xf] %v900
        %909 = vst [vmem:[%s211 + $0x4] sm:$0xf] %v901
        %910 = vst [vmem:[%s211 + $0x8] sm:$0xf] %v902
        %911 = vst [vmem:[%s211 + $0xc] sm:$0xf] %v903
        %s912 = sand.u32 %s97, 1
        %s913 = scalar_lea.sflag [#allocation4], %s912
        %s914 = sand.u32 %s97, 1
        %s915 = smul.addr %s914, 16
        %s916 = scalar_lea.vmem [#allocation7], %s915
        // Predicated region
        $region41: #{tpu_custom_call.1} parent=31 // pred_check
          %p917 = pneg %p107
        $region42: #{tpu_custom_call.1} parent=31 // pred_check_branch
          %919 = sbr.rel (%p917) target = $region44
        $region43: #{tpu_custom_call.1} parent=31 // pred_region
          %s920 = smul.u32 4, %s21
          %s921 = ssub.s32 5, %s920
          %p922 = scmp.lt.s32.totalorder %s921, 4
          %s923 = scalar_select %p922, %s921, 4
          %s924 = smul.u32 64, %s923
          %s926 = ssub.s32 256, %s924
          %927 = vsyncadd %s913, %s926
          %p928 = scmp.ne.s32.totalorder 0, %s924
          %s929 = smul.addr %s920, 64
          %s930 = scalar_lea.hbm %s3, %s929
          %s931 = smul.u32 4, %s923
          %s932 = sshll.u32 %s916, 4
          %s933 = int_to_ptr.vmem [resolvable:$true] %s932
          %s934 = sshll.u32 %s931, 4
          %938 = dma.vmem_to_hbm [thread:$0]  (%p928), %s933, %s934, %s930, %s913, 64, 64, 4
        $region44: #{tpu_custom_call.1} parent=31 // pred_fallthru
          _
      $region32: #{tpu_custom_call.1} parent=5 // pred_fallthru
        _
      %p939 = scmp.le.s32.totalorder 2, %s16
      // Predicated region
      $region45: #{tpu_custom_call.1} parent=5 // pred_check
        %p940 = pneg %p939
      $region46: #{tpu_custom_call.1} parent=5 // pred_check_branch
        %942 = sbr.rel (%p940) target = $region48
      $region47: #{tpu_custom_call.1} parent=5 // pred_region
        %s943 = ssub.s32 %s16, 2
        // Predicated region
        $region49: #{tpu_custom_call.1} parent=47 // pred_check
          %p944 = pneg %p113
        $region50: #{tpu_custom_call.1} parent=47 // pred_check_branch
          %946 = sbr.rel (%p944) target = $region52
        $region51: #{tpu_custom_call.1} parent=47 // pred_region
          %s947 = sand.u32 %s98, 1
          %s948 = scalar_lea.sflag [#allocation4], %s947
          %s949 = sand.u32 %s98, 1
          %s950 = smul.addr %s949, 16
          %s951 = scalar_lea.vmem [#allocation7], %s950
          %952 = dma.done %s948, 256
        $region52: #{tpu_custom_call.1} parent=47 // pred_fallthru
          _
      $region48: #{tpu_custom_call.1} parent=5 // pred_fallthru
        _
    $region6: #{tpu_custom_call.1} parent=1 // loop_footer
      %s20 = sadd.s32 1, %s16
    $region7: #{tpu_custom_call.1} parent=1 // loop_footer_branch
      %15 = sbr.rel target = $region3
    $region8: #{tpu_custom_call.1} parent=1 // loop_exit
      _
    %953 = vsyncpa [#allocation3], 1
    %s954 = scalar_lea.sflag [#allocation3], 1
    %955 = vsyncpa %s954, 1
    %956 = vsyncpa [#allocation6], 1
    %957 = vsyncpa [#allocation4], 1
    %s958 = scalar_lea.sflag [#allocation4], 1
    %959 = vsyncpa %s958, 1

</llo_original>
